<compile_context>
chip_gen: v7x
topology: tpu7x:2x2x1
jax: 0.10.0
libtpu: 0.0.40
codegen_flags: <defaults>
</compile_context>

<pallas_src>
import jax
import jax.numpy as jnp
from jax.experimental import pallas as pl
from jax.experimental.pallas import tpu as pltpu


def _round_up(x, m):
    return ((x + m - 1) // m) * m


def prepare_dense_params(weight, bias):
    """One-time parameter prep (call at init time, NOT per forward call).

    weight: (d_out, d_in)  -- PyTorch nn.Linear layout
    bias:   (d_out,)
    returns (w_t, b2d) with w_t: (d_in, d_out), b2d: (1, d_out)
    """
    w_t = jnp.asarray(weight).T          # standard (K, N) contraction operand
    b2d = jnp.asarray(bias).reshape(1, -1)
    return w_t, b2d


def _dense_kernel(x_ref, w_ref, b_ref, o_ref):
    # x_ref: (tm, d_in), w_ref: (d_in, d_out), b_ref: (1, d_out),
    # o_ref: (tm, d_out).  Native-dtype operands, f32 accumulation on the MXU.
    y = jnp.dot(x_ref[...], w_ref[...], preferred_element_type=jnp.float32)
    y = y + b_ref[...].astype(jnp.float32)
    o_ref[...] = y.astype(o_ref.dtype)


def _pick_batch_tile(b_al, block_b):
    """Pick a batch tile (multiple of 8) that keeps tail padding small and,
    when possible, yields >= 2 grid steps (v7x megacore)."""
    tm = min(block_b, b_al)
    # Shrink tm while tail-padding waste exceeds ~1/8 of the real rows.
    while tm > 8 and (_round_up(b_al, tm) - b_al) * 8 > b_al:
        tm = max(8, _round_up(tm // 2, 8))
    # Ensure >= 2 grid steps so both TensorCores get a block (v7x), when the
    # batch is large enough to split.
    if _round_up(b_al, tm) // tm < 2 and tm >= 16:
        tm = max(8, _round_up(tm // 2, 8))
    return tm


def dense_forward(x, w_t, b2d, *, block_b=2048):
    """Equivalent of Dense.forward: (x @ W.T + b)[..., None, None].

    x:   (B, d_in)
    w_t: (d_in, d_out)   -- from prepare_dense_params (pre-transposed once)
    b2d: (1, d_out)      -- from prepare_dense_params
    returns (B, d_out, 1, 1)
    """
    B, d_in = x.shape
    d_in_w, d_out = w_t.shape
    assert d_in == d_in_w, (d_in, d_in_w)
    assert b2d.shape == (1, d_out), b2d.shape

    # Sublane-aligned batch tiling; pad only the batch axis (if needed).
    b_al = _round_up(B, 8)
    tm = _pick_batch_tile(b_al, block_b)
    b_p = _round_up(b_al, tm)
    if b_p != B:
        x = jnp.pad(x, ((0, b_p - B), (0, 0)))

    itemsize = x.dtype.itemsize
    cost = pl.CostEstimate(
        flops=2 * b_p * d_in * d_out,
        transcendentals=0,
        bytes_accessed=(b_p * d_in + d_in * d_out + d_out + b_p * d_out) * itemsize,
    )

    y = pl.pallas_call(
        _dense_kernel,
        out_shape=jax.ShapeDtypeStruct((b_p, d_out), x.dtype),
        grid_spec=pl.GridSpec(
            grid=(b_p // tm,),
            in_specs=[
                # x: tiled over the batch axis.
                pl.BlockSpec((tm, d_in), lambda i: (i, 0)),
                # weight: resident across the whole grid.
                pl.BlockSpec((d_in, d_out), lambda i: (0, 0)),
                # bias: resident across the whole grid.
                pl.BlockSpec((1, d_out), lambda i: (0, 0)),
            ],
            # Output block last dim == full d_out (legal; avoids 16->128
            # padding and the extra wrapper slice pass).
            out_specs=pl.BlockSpec((tm, d_out), lambda i: (i, 0)),
        ),
        compiler_params=pltpu.CompilerParams(
            dimension_semantics=("parallel",),
            # NOTE(v7x): if tm / d_out grow, set vmem_limit_bytes and
            # re-derive the tile budget against 64 MiB physical VMEM.
        ),
        cost_estimate=cost,
    )(x, w_t, b2d)

    if b_p != B:
        y = y[:B]
    # Append the two trailing singleton dims (glue, done in the wrapper).
    return y[..., None, None]


if __name__ == "__main__":
    key = jax.random.PRNGKey(0)
    kx, kw, kb = jax.random.split(key, 3)

    B = 2
    input_dim = 32     # e.g. time-embedding dim
    output_dim = 16    # channel count of the feature map it conditions

    # Deterministic parameter init (PyTorch Linear: U(-1/sqrt(fan_in), +))
    bound = 1.0 / jnp.sqrt(jnp.float32(input_dim))
    weight = jax.random.uniform(
        kw, (output_dim, input_dim), jnp.float32, minval=-bound, maxval=bound
    )
    bias = jax.random.uniform(
        kb, (output_dim,), jnp.float32, minval=-bound, maxval=bound
    )
    x = jax.random.normal(kx, (B, input_dim), jnp.float32)

    # One-time parameter prep (init-time, not per call).
    w_t, b2d = prepare_dense_params(weight, bias)

    out = dense_forward(x, w_t, b2d)
    out = jax.block_until_ready(out)

    # Correctness check vs pure-JAX reference
    ref = (x @ weight.T + bias)[..., None, None]
    assert out.shape == (B, output_dim, 1, 1), out.shape
    assert jnp.allclose(out, ref, atol=1e-5, rtol=1e-5), "mismatch vs reference"

    print("KERNEL_OK")
</pallas_src>

<mosaic_0001>
module attributes {stable_mosaic.version = 11 : i64} {
  func.func @_dense_kernel(%arg0: i32, %arg1: memref<8x32xf32, #tpu.memory_space<vmem>>, %arg2: memref<32x16xf32, #tpu.memory_space<vmem>>, %arg3: memref<1x16xf32, #tpu.memory_space<vmem>>, %arg4: memref<8x16xf32, #tpu.memory_space<vmem>>) attributes {dimension_semantics = [#tpu.dimension_semantics<parallel>], iteration_bounds = array<i64: 1>, scalar_prefetch = 0 : i64, scratch_operands = 0 : i64, tpu.core_type = #tpu.core_type<tc>, window_params = [{transform_indices = @transform_0, window_bounds = array<i64: 8, 32>}, {pipeline_mode = #tpu.pipeline_mode<synchronous>, transform_indices = @transform_1, window_bounds = array<i64: 32, 16>}, {pipeline_mode = #tpu.pipeline_mode<synchronous>, transform_indices = @transform_2, window_bounds = array<i64: 1, 16>}, {transform_indices = @transform_3, window_bounds = array<i64: 8, 16>}]} {
    %c0 = arith.constant 0 : index
    %c0_0 = arith.constant 0 : index
    %0 = vector.load %arg1[%c0, %c0_0] : memref<8x32xf32, #tpu.memory_space<vmem>>, vector<8x32xf32>
    %c0_1 = arith.constant 0 : index
    %c0_2 = arith.constant 0 : index
    %1 = vector.load %arg2[%c0_1, %c0_2] : memref<32x16xf32, #tpu.memory_space<vmem>>, vector<32x16xf32>
    %cst = arith.constant dense<0.000000e+00> : vector<8x16xf32>
    %2 = tpu.matmul %0, %1, %cst {dimension_numbers = #tpu.dot_dimension_numbers<[1], [0], [0], [1], [0, 0, 1, 1], [], []>} : vector<8x32xf32>, vector<32x16xf32>, vector<8x16xf32> -> vector<8x16xf32>
    %c0_3 = arith.constant 0 : index
    %c0_4 = arith.constant 0 : index
    %3 = vector.load %arg3[%c0_3, %c0_4] : memref<1x16xf32, #tpu.memory_space<vmem>>, vector<1x16xf32>
    %4 = vector.broadcast %3 : vector<1x16xf32> to vector<8x16xf32>
    %5 = arith.addf %2, %4 : vector<8x16xf32>
    %c0_5 = arith.constant 0 : index
    %c0_6 = arith.constant 0 : index
    %6 = vector.load %arg4[%c0_5, %c0_6] : memref<8x16xf32, #tpu.memory_space<vmem>>, vector<8x16xf32>
    tpu.vector_store %arg4[%c0_5, %c0_6], %5 {strides = array<i32>} : memref<8x16xf32, #tpu.memory_space<vmem>>, vector<8x16xf32>,
    return
  }
  func.func @transform_0(%arg0: i32) -> (i32, i32) {
    %c0_i32 = arith.constant 0 : i32
    %c0_i32_0 = arith.constant 0 : i32
    return %arg0, %c0_i32 : i32, i32
  }
  func.func @transform_1(%arg0: i32) -> (i32, i32) {
    %c0_i32 = arith.constant 0 : i32
    %c0_i32_0 = arith.constant 0 : i32
    %c0_i32_1 = arith.constant 0 : i32
    return %c0_i32, %c0_i32_0 : i32, i32
  }
  func.func @transform_2(%arg0: i32) -> (i32, i32) {
    %c0_i32 = arith.constant 0 : i32
    %c0_i32_0 = arith.constant 0 : i32
    %c0_i32_1 = arith.constant 0 : i32
    return %c0_i32, %c0_i32_0 : i32, i32
  }
  func.func @transform_3(%arg0: i32) -> (i32, i32) {
    %c0_i32 = arith.constant 0 : i32
    %c0_i32_0 = arith.constant 0 : i32
    return %arg0, %c0_i32 : i32, i32
  }
}

</mosaic_0001>

<llo_original>
// kernel: tpu_custom_call.1
$region0: #{tpu_custom_call.1}
  #allocation0 [shape = 'u32[]', space=smem, size = 0x4, offset = 0x4, fixed_abs, tag = 'smem constant byte address 0x4 - core index']
  #allocation1 [shape = 'u32[144,128]{1,0:T(1,128)}', space=vmem, size = 0x12000, scoped, tag = 'internal scratch']
  %s0 = inlined_call_operand.vmem [shape: f32[8,32], index: 0, kind: input, shape index: {}]
  %s1 = inlined_call_operand.vmem [shape: f32[32,16], index: 1, kind: input, shape index: {}]
  %s2 = inlined_call_operand.vmem [shape: f32[1,16], index: 2, kind: input, shape index: {}]
  %s3 = inlined_call_operand.hbm [shape: f32[8,16], index: 3, kind: output, shape index: {}]
  %s4 = sld [smem:[#allocation0]]
  $region22: #{tpu_custom_call.1} parent=0
    _
  %s6 = ssub.s32 1, %s4
  %s7 = scalar_select 0, %s6, %s4
  $region1: #{tpu_custom_call.1} parent=0
    #allocation2 [shape = 'u8[4096]{0}', space=vmem, size = 0x1000, scoped, tag = 'output window, operand 0, single buffered']
    #allocation3 [shape = 's32[1]{0}', space=sflag, size = 0x4, scoped, tag = 'scoped memory for tpu_custom_call.1']
    %8 = vsyncpa [#allocation3], 0
    // Predicated region
    $region2: #{tpu_custom_call.1} parent=1 // pred_check
      _
    $region3: #{tpu_custom_call.1} parent=1 // pred_check_branch
      %10 = sbr.rel (0) target = $region5
    $region4: #{tpu_custom_call.1} parent=1 // pred_region
      _
    $region5: #{tpu_custom_call.1} parent=1 // pred_fallthru
      _
    // Predicated region
    $region6: #{tpu_custom_call.1} parent=1 // pred_check
      _
    $region7: #{tpu_custom_call.1} parent=1 // pred_check_branch
      %12 = sbr.rel (0) target = $region9
    $region8: #{tpu_custom_call.1} parent=1 // pred_region
      _
    $region9: #{tpu_custom_call.1} parent=1 // pred_fallthru
      _
    // Predicated region
    $region10: #{tpu_custom_call.1} parent=1 // pred_check
      _
    $region11: #{tpu_custom_call.1} parent=1 // pred_check_branch
      %14 = sbr.rel (0) target = $region13
    $region12: #{tpu_custom_call.1} parent=1 // pred_region
      _
    $region13: #{tpu_custom_call.1} parent=1 // pred_fallthru
      _
    %v15 = vld [vmem:[%s0] sm:$0xff]
    %v16 = vld [vmem:[%s1] sm:$0xff]
    %v17 = vld [vmem:[%s1 + $0x8] sm:$0xff]
    %v18 = vld [vmem:[%s1 + $0x10] sm:$0xff]
    %v19 = vld [vmem:[%s1 + $0x18] sm:$0xff]
    %v20 = vld [vmem:[%s2] sm:$0x1]
    %v22 = vlaneseq
    %v23 = vshrl.u32 %v22, 7
    %v24 = vsub.s32 0, %v23
    %v25 = vrot.slane %v20, %v24
    %vm27 = vcmask 261120
    %v29 = vsel %vm27, %v15, 0
    %31 = vmatprep.subr.mxu0 0.0
    %32 = vmatpush1.msra.mxu0 %v16
    %33 = vmatprep.subr.mxu0 0.0
    %34 = vmatpush1.msra.mxu0 %v17
    %35 = vmatprep.subr.mxu0 0.0
    %36 = vmatpush1.msra.mxu0 %v18
    %37 = vmatprep.subr.mxu0 0.0
    %38 = vmatpush1.msra.mxu0 %v19
    %39 = vmatprep.subr.mxu0 0.0
    %40 = vmatpush1.msra.mxu0 0.0
    %41 = vmatprep.subr.mxu0 0.0
    %42 = vmatpush1.msra.mxu0 0.0
    %43 = vmatprep.subr.mxu0 0.0
    %44 = vmatpush1.msra.mxu0 0.0
    %45 = vmatprep.subr.mxu0 0.0
    %46 = vmatpush1.msra.mxu0 0.0
    %47 = vmatprep.subr.mxu0 0.0
    %48 = vmatpush1.msra.mxu0 0.0
    %49 = vmatprep.subr.mxu0 0.0
    %50 = vmatpush1.msra.mxu0 0.0
    %51 = vmatprep.subr.mxu0 0.0
    %52 = vmatpush1.msra.mxu0 0.0
    %53 = vmatprep.subr.mxu0 0.0
    %54 = vmatpush1.msra.mxu0 0.0
    %55 = vmatprep.subr.mxu0 0.0
    %56 = vmatpush1.msra.mxu0 0.0
    %57 = vmatprep.subr.mxu0 0.0
    %58 = vmatpush1.msra.mxu0 0.0
    %59 = vmatprep.subr.mxu0 0.0
    %60 = vmatpush1.msra.mxu0 0.0
    %61 = vmatprep.subr.mxu0 0.0
    %62 = vmatpush1.msra.mxu0 0.0
    %63 = vmatprep.subr.mxu0 0.0
    %64 = vmatpush1.msra.mxu0 0.0
    %65 = vmatprep.subr.mxu0 0.0
    %66 = vmatpush1.msra.mxu0 0.0
    %67 = vmatprep.subr.mxu0 0.0
    %68 = vmatpush1.msra.mxu0 0.0
    %69 = vmatprep.subr.mxu0 0.0
    %70 = vmatpush1.msra.mxu0 0.0
    %71 = vmatprep.subr.mxu0 0.0
    %72 = vmatpush1.msra.mxu0 0.0
    %73 = vmatprep.subr.mxu0 0.0
    %74 = vmatpush1.msra.mxu0 0.0
    %75 = vmatprep.subr.mxu0 0.0
    %76 = vmatpush1.msra.mxu0 0.0
    %77 = vmatprep.subr.mxu0 0.0
    %78 = vmatpush1.msra.mxu0 0.0
    %79 = vmatprep.subr.mxu0 0.0
    %80 = vmatpush1.msra.mxu0 0.0
    %81 = vmatprep.subr.mxu0 0.0
    %82 = vmatpush1.msra.mxu0 0.0
    %83 = vmatprep.subr.mxu0 0.0
    %84 = vmatpush1.msra.mxu0 0.0
    %85 = vmatprep.subr.mxu0 0.0
    %86 = vmatpush1.msra.mxu0 0.0
    %87 = vmatprep.subr.mxu0 0.0
    %88 = vmatpush1.msra.mxu0 0.0
    %89 = vmatprep.subr.mxu0 0.0
    %90 = vmatpush1.msra.mxu0 0.0
    %91 = vmatprep.subr.mxu0 0.0
    %92 = vmatpush1.msra.mxu0 0.0
    %93 = vmatprep.subr.mxu0 0.0
    %94 = vmatpush1.msra.mxu0 0.0
    %95 = vmatprep.mubr.f32.mxu0 0.0
    %96 = vmatmul.mubr.f32.gmra.mrb[0].mxu0 %v29
    %v97 = vpop.f32.mrb[0].mxu0
    %v98 = vadd.f32 %v25, %v97
    %v99 = vpop.f32.mrb[0].mxu0
    %100 = vdwg.mxu0
    %vm101 = vcmask 130048
    %102 = vst.msk [vmem:[#allocation2] sm:$0xff] %vm101, %v98
    // Predicated region
    $region14: #{tpu_custom_call.1} parent=1 // pred_check
      _
    $region15: #{tpu_custom_call.1} parent=1 // pred_check_branch
      %104 = sbr.rel (0) target = $region17
    $region16: #{tpu_custom_call.1} parent=1 // pred_region
      %s106 = ssub.s32 128, 128
      %107 = vsyncadd [#allocation3], %s106
      %s109 = sshll.u32 [#allocation2], 4
      %s110 = int_to_ptr.vmem [resolvable:$true] %s109
      %112 = dma.vmem_to_hbm [thread:$0]  %s110, 128, %s3, [#allocation3]
    $region17: #{tpu_custom_call.1} parent=1 // pred_fallthru
      _
    // Predicated region
    $region18: #{tpu_custom_call.1} parent=1 // pred_check
      _
    $region19: #{tpu_custom_call.1} parent=1 // pred_check_branch
      %114 = sbr.rel (0) target = $region21
    $region20: #{tpu_custom_call.1} parent=1 // pred_region
      %115 = dma.done [#allocation3], 128
    $region21: #{tpu_custom_call.1} parent=1 // pred_fallthru
      _
    %116 = vsyncpa [#allocation3], 1

</llo_original>
